<compile_context>
chip_gen: v7x
topology: tpu7x:2x2x1
jax: 0.10.0
libtpu: 0.0.40
codegen_flags: <defaults>
</compile_context>

<pallas_src>
import functools

import jax
import jax.numpy as jnp
from jax.experimental import pallas as pl
from jax.experimental.pallas import tpu as pltpu


# ----------------------------------------------------------------------------
# Pallas kernel: fused (conv1x1+BN) x3 + relu + sigmoid + gating, channel-minor
# ----------------------------------------------------------------------------
def _attention_block_kernel(g_ref, x_ref, wg_ref, wx_ref, b_ref,
                            wpsi_ref, bpsi_ref, o_ref):
    # Wg @ g and Wx @ x on the MXU, f32 accumulation (inputs/weights may be bf16).
    g1 = jnp.dot(wg_ref[...], g_ref[...], preferred_element_type=jnp.float32)
    x1 = jnp.dot(wx_ref[...], x_ref[...], preferred_element_type=jnp.float32)

    # Combined bias (bg + bx) pre-added in the wrapper, broadcast over lanes.
    r = jnp.maximum(g1 + x1 + b_ref[...], 0.0)                  # (Cout, TS) f32

    # psi: (1, Cout) @ (Cout, TS) -> lane-dense (1, TS); bpsi is an SMEM scalar.
    psi_lin = jnp.dot(wpsi_ref[...], r, preferred_element_type=jnp.float32)
    psi = jax.nn.sigmoid(psi_lin + bpsi_ref[0, 0])              # (1, TS) f32

    # Gate x by psi (sublane broadcast of the 1-row psi).
    o_ref[...] = (x_ref[...].astype(jnp.float32) * psi).astype(o_ref.dtype)


# ----------------------------------------------------------------------------
# Helpers
# ----------------------------------------------------------------------------
def _fold_bn(conv_w, conv_b, gamma, beta, mean, var, eps=1e-5):
    """Fold conv1x1x1 (Cout, Cin) + eval-mode BN into a (Cout, Cin) matmul + bias."""
    scale = gamma / jnp.sqrt(var + eps)                 # (Cout,)
    w_eff = conv_w * scale[:, None]                     # (Cout, Cin)
    b_eff = (conv_b - mean) * scale + beta              # (Cout,)
    return w_eff, b_eff


def _vmem_capacity_bytes():
    try:
        return int(pltpu.get_tpu_info().vmem_capacity_bytes)
    except Exception:
        return 64 * 1024 * 1024    # conservative fallback (v7x per-core VMEM)


def _pick_spatial_tile(S, cin, cout, cbytes, obytes, vmem_cap, bufs):
    """Largest lane-dense spatial tile whose pipelined buffers + f32
    intermediates fit the VMEM budget.  Returns (ts, pad)."""
    # Weights are resident (double-buffered by Pallas even though constant).
    weight_bytes = 2 * 4 * (cout * cin + cout * cout + 2 * cout + 2)
    budget = max(int(vmem_cap * 0.6) - weight_bytes, 2 * 1024 * 1024)
    # Per spatial element resident in VMEM:
    #   pipelined g/x/out tiles + f32 intermediates (g1, x1, r, psi + slack).
    per_elem = (bufs * ((cin + cout) * cbytes + cout * obytes)
                + (3 * cout + 2) * 4)
    cap = max(128, (budget // per_elem) // 128 * 128)
    cands = [c for c in (8192, 4096, 2048, 1024, 512, 256, 128) if c <= cap]
    if not cands:
        cands = [128]
    for c in cands:                       # prefer exact divisors: no padding
        if S % c == 0:
            return c, 0
    for c in cands:                       # allow a small padded remainder
        pad = (-S) % c
        if pad <= max(c // 8, 128) or pad * 8 <= S:
            return c, pad
    c = cands[-1]
    return c, (-S) % c


def _io_spec(block_shape, index_map, bufs):
    """BlockSpec with optional deeper pipelining on the streamed tiles."""
    if bufs > 2 and hasattr(pl, "Buffered"):
        try:
            return pl.BlockSpec(block_shape, index_map,
                                pipeline_mode=pl.Buffered(bufs))
        except TypeError:
            pass
    return pl.BlockSpec(block_shape, index_map)


# ----------------------------------------------------------------------------
# Wrapper
# ----------------------------------------------------------------------------
@functools.partial(jax.jit, static_argnames=("compute_dtype", "out_dtype"))
def attention_block(g, x, params, *, compute_dtype=jnp.bfloat16, out_dtype=None):
    """g: (N, Cin, D, H, W), x: (N, Cout, D, H, W)  ->  (N, Cout, D, H, W).

    Eval-mode BatchNorm (running stats folded into the convs).  The big g/x
    streams run through the kernel in `compute_dtype`; output is `out_dtype`
    (defaults to x.dtype).
    """
    N, Cin, D, H, W = g.shape
    Cout = x.shape[1]
    S = D * H * W
    out_dtype = out_dtype or x.dtype
    cbytes = jnp.dtype(compute_dtype).itemsize
    obytes = jnp.dtype(out_dtype).itemsize

    # --- VMEM / generation-aware tiling ------------------------------------
    vmem_cap = _vmem_capacity_bytes()
    bufs = 3 if vmem_cap >= 128 * 1024 * 1024 else 2        # 3-deep on v5e/v6e
    ts, pad = _pick_spatial_tile(S, Cin, Cout, cbytes, obytes, vmem_cap, bufs)
    # v7x megacore: ensure at least 2 grid blocks so both TensorCores get work.
    if N * ((S + pad) // ts) < 2 and ts >= 256:
        ts //= 2
        pad = (-S) % ts
    S_pad = S + pad
    vmem_limit = max(32 * 1024 * 1024,
                     min(int(vmem_cap * 0.75), 100 * 1024 * 1024))

    # --- Fold conv + BN (eval mode) into affine matmuls ---------------------
    wg, bg = _fold_bn(params["wg"], params["bg_conv"], params["g_gamma"],
                      params["g_beta"], params["g_mean"], params["g_var"])
    wx, bx = _fold_bn(params["wx"], params["bx_conv"], params["x_gamma"],
                      params["x_beta"], params["x_mean"], params["x_var"])
    wpsi, bpsi = _fold_bn(params["wpsi"], params["bpsi_conv"], params["p_gamma"],
                          params["p_beta"], params["p_mean"], params["p_var"])

    wg = wg.astype(compute_dtype)                              # (Cout, Cin)
    wx = wx.astype(compute_dtype)                              # (Cout, Cout)
    b = (bg + bx).reshape(Cout, 1).astype(jnp.float32)         # (Cout, 1)
    wpsi = wpsi.reshape(1, Cout).astype(jnp.float32)           # (1, Cout)
    bpsi = bpsi.reshape(1, 1).astype(jnp.float32)              # SMEM scalar

    # --- Metadata reshapes + bf16 cast (+ lane-dense padding if ragged) -----
    g3 = g.reshape(N, Cin, S).astype(compute_dtype)
    x3 = x.reshape(N, Cout, S).astype(compute_dtype)
    if pad:
        g3 = jnp.pad(g3, ((0, 0), (0, 0), (0, pad)))
        x3 = jnp.pad(x3, ((0, 0), (0, 0), (0, pad)))

    grid = (N, S_pad // ts)

    flops = 2 * N * S_pad * Cout * (Cin + Cout + 1)
    transcendentals = N * S_pad
    bytes_accessed = (N * S_pad * ((Cin + Cout) * cbytes + Cout * obytes)
                      + 4 * (Cout * Cin + Cout * Cout + 2 * Cout + 2))

    # Alias x3 -> out only when dtypes match (saves one (N,Cout,S) HBM alloc).
    io_alias = {1: 0} if jnp.dtype(compute_dtype) == jnp.dtype(out_dtype) else {}

    out3 = pl.pallas_call(
        _attention_block_kernel,
        out_shape=jax.ShapeDtypeStruct((N, Cout, S_pad), out_dtype),
        grid_spec=pltpu.PrefetchScalarGridSpec(
            num_scalar_prefetch=0,
            grid=grid,
            in_specs=[
                _io_spec((None, Cin, ts), lambda n, s: (n, 0, s), bufs),   # g
                _io_spec((None, Cout, ts), lambda n, s: (n, 0, s), bufs),  # x
                pl.BlockSpec((Cout, Cin), lambda n, s: (0, 0)),            # Wg
                pl.BlockSpec((Cout, Cout), lambda n, s: (0, 0)),           # Wx
                pl.BlockSpec((Cout, 1), lambda n, s: (0, 0)),              # bg+bx
                pl.BlockSpec((1, Cout), lambda n, s: (0, 0)),              # Wpsi
                pl.BlockSpec(memory_space=pltpu.MemorySpace.SMEM),         # bpsi
            ],
            out_specs=_io_spec((None, Cout, ts), lambda n, s: (n, 0, s), bufs),
        ),
        compiler_params=pltpu.CompilerParams(
            dimension_semantics=("parallel", "parallel"),
            vmem_limit_bytes=vmem_limit),
        cost_estimate=pl.CostEstimate(
            flops=int(flops),
            transcendentals=int(transcendentals),
            bytes_accessed=int(bytes_accessed)),
        input_output_aliases=io_alias,
    )(g3, x3, wg, wx, b, wpsi, bpsi)

    if pad:
        out3 = out3[..., :S]
    return out3.reshape(N, Cout, D, H, W).astype(out_dtype)


# ----------------------------------------------------------------------------
# Pure-JAX reference (same eval-mode BN + same bf16 rounding) for validation.
# ----------------------------------------------------------------------------
def attention_block_ref(g, x, params, compute_dtype=jnp.bfloat16, out_dtype=None):
    out_dtype = out_dtype or x.dtype
    wg, bg = _fold_bn(params["wg"], params["bg_conv"], params["g_gamma"],
                      params["g_beta"], params["g_mean"], params["g_var"])
    wx, bx = _fold_bn(params["wx"], params["bx_conv"], params["x_gamma"],
                      params["x_beta"], params["x_mean"], params["x_var"])
    wpsi, bpsi = _fold_bn(params["wpsi"], params["bpsi_conv"], params["p_gamma"],
                          params["p_beta"], params["p_mean"], params["p_var"])
    N, Cin, D, H, W = g.shape
    Cout = x.shape[1]
    S = D * H * W
    # Mirror the kernel's bf16 streaming / bf16 matmul operands.
    wg = wg.astype(compute_dtype).astype(jnp.float32)
    wx = wx.astype(compute_dtype).astype(jnp.float32)
    gf = g.reshape(N, Cin, S).astype(compute_dtype).astype(jnp.float32)
    xf = x.reshape(N, Cout, S).astype(compute_dtype).astype(jnp.float32)
    hi = jax.lax.Precision.HIGHEST
    g1 = jnp.einsum("oc,ncs->nos", wg, gf, precision=hi) + bg[None, :, None]
    x1 = jnp.einsum("oc,ncs->nos", wx, xf, precision=hi) + bx[None, :, None]
    r = jnp.maximum(g1 + x1, 0.0)
    psi = jax.nn.sigmoid(
        jnp.einsum("oc,ncs->nos", wpsi.astype(jnp.float32), r, precision=hi)
        + bpsi[None, :, None])
    out = xf * psi
    return out.reshape(N, Cout, D, H, W).astype(out_dtype)


# ----------------------------------------------------------------------------
# Demo / self-test
# ----------------------------------------------------------------------------
if __name__ == "__main__":
    key = jax.random.PRNGKey(0)
    N, Cin, Cout, D, H, W = 2, 8, 8, 8, 8, 8   # S = D*H*W = 512 (lane-dense)

    ks = jax.random.split(key, 18)
    params = {
        # conv weights (Cout, Cin) / (Cout,) -- PyTorch 1x1x1 conv collapsed
        "wg": jax.random.normal(ks[0], (Cout, Cin), jnp.float32) * 0.1,
        "bg_conv": jax.random.normal(ks[1], (Cout,), jnp.float32) * 0.1,
        "wx": jax.random.normal(ks[2], (Cout, Cout), jnp.float32) * 0.1,
        "bx_conv": jax.random.normal(ks[3], (Cout,), jnp.float32) * 0.1,
        "wpsi": jax.random.normal(ks[4], (1, Cout), jnp.float32) * 0.1,
        "bpsi_conv": jax.random.normal(ks[5], (1,), jnp.float32) * 0.1,
        # BatchNorm params (eval mode: gamma, beta, running mean/var)
        "g_gamma": 1.0 + 0.1 * jax.random.normal(ks[6], (Cout,), jnp.float32),
        "g_beta": 0.1 * jax.random.normal(ks[7], (Cout,), jnp.float32),
        "g_mean": 0.1 * jax.random.normal(ks[8], (Cout,), jnp.float32),
        "g_var": 1.0 + 0.1 * jax.random.uniform(ks[9], (Cout,), jnp.float32),
        "x_gamma": 1.0 + 0.1 * jax.random.normal(ks[10], (Cout,), jnp.float32),
        "x_beta": 0.1 * jax.random.normal(ks[11], (Cout,), jnp.float32),
        "x_mean": 0.1 * jax.random.normal(ks[12], (Cout,), jnp.float32),
        "x_var": 1.0 + 0.1 * jax.random.uniform(ks[13], (Cout,), jnp.float32),
        "p_gamma": jnp.ones((1,), jnp.float32),
        "p_beta": jnp.zeros((1,), jnp.float32),
        "p_mean": jnp.zeros((1,), jnp.float32),
        "p_var": jnp.ones((1,), jnp.float32),
    }

    g = jax.random.normal(ks[16], (N, Cin, D, H, W), jnp.float32)
    x = jax.random.normal(ks[17], (N, Cout, D, H, W), jnp.float32)

    out = attention_block(g, x, params)
    out = jax.block_until_ready(out)

    ref = attention_block_ref(g, x, params)
    assert out.shape == (N, Cout, D, H, W)
    assert out.dtype == x.dtype
    assert jnp.allclose(out, ref, atol=5e-3, rtol=5e-3), "mismatch vs reference"

    print("KERNEL_OK")
</pallas_src>

<mosaic_0001>
module attributes {stable_mosaic.version = 11 : i64} {
  func.func @_attention_block_kernel(%arg0: i32, %arg1: i32, %arg2: memref<1x8x512xbf16, #tpu.memory_space<vmem>>, %arg3: memref<1x8x512xbf16, #tpu.memory_space<vmem>>, %arg4: memref<8x8xbf16, #tpu.memory_space<vmem>>, %arg5: memref<8x8xbf16, #tpu.memory_space<vmem>>, %arg6: memref<8x1xf32, #tpu.memory_space<vmem>>, %arg7: memref<1x8xf32, #tpu.memory_space<vmem>>, %arg8: memref<1x1xf32, #tpu.memory_space<smem>>, %arg9: memref<1x8x512xf32, #tpu.memory_space<vmem>>) attributes {dimension_semantics = [#tpu.dimension_semantics<parallel>, #tpu.dimension_semantics<parallel>], iteration_bounds = array<i64: 2, 1>, scalar_prefetch = 0 : i64, scratch_operands = 0 : i64, tpu.core_type = #tpu.core_type<tc>, window_params = [{transform_indices = @transform_0, window_bounds = array<i64: 1, 8, 512>}, {transform_indices = @transform_1, window_bounds = array<i64: 1, 8, 512>}, {pipeline_mode = #tpu.pipeline_mode<synchronous>, transform_indices = @transform_2, window_bounds = array<i64: 8, 8>}, {pipeline_mode = #tpu.pipeline_mode<synchronous>, transform_indices = @transform_3, window_bounds = array<i64: 8, 8>}, {pipeline_mode = #tpu.pipeline_mode<synchronous>, transform_indices = @transform_4, window_bounds = array<i64: 8, 1>}, {pipeline_mode = #tpu.pipeline_mode<synchronous>, transform_indices = @transform_5, window_bounds = array<i64: 1, 8>}, {transform_indices = @transform_6, window_bounds = array<i64: 1, 1>}, {transform_indices = @transform_7, window_bounds = array<i64: 1, 8, 512>}]} {
    %c0 = arith.constant 0 : index
    %c0_0 = arith.constant 0 : index
    %0 = vector.load %arg4[%c0, %c0_0] : memref<8x8xbf16, #tpu.memory_space<vmem>>, vector<8x8xbf16>
    %c0_1 = arith.constant 0 : index
    %c0_2 = arith.constant 0 : index
    %c0_3 = arith.constant 0 : index
    %1 = vector.load %arg2[%c0_1, %c0_2, %c0_3] : memref<1x8x512xbf16, #tpu.memory_space<vmem>>, vector<1x8x512xbf16>
    %2 = vector.shape_cast %1 : vector<1x8x512xbf16> to vector<8x512xbf16>
    %cst = arith.constant dense<0.000000e+00> : vector<8x512xf32>
    %3 = tpu.matmul %0, %2, %cst {dimension_numbers = #tpu.dot_dimension_numbers<[1], [0], [0], [1], [0, 0, 1, 1], [], []>} : vector<8x8xbf16>, vector<8x512xbf16>, vector<8x512xf32> -> vector<8x512xf32>
    %c0_4 = arith.constant 0 : index
    %c0_5 = arith.constant 0 : index
    %4 = vector.load %arg5[%c0_4, %c0_5] : memref<8x8xbf16, #tpu.memory_space<vmem>>, vector<8x8xbf16>
    %c0_6 = arith.constant 0 : index
    %c0_7 = arith.constant 0 : index
    %c0_8 = arith.constant 0 : index
    %5 = vector.load %arg3[%c0_6, %c0_7, %c0_8] : memref<1x8x512xbf16, #tpu.memory_space<vmem>>, vector<1x8x512xbf16>
    %6 = vector.shape_cast %5 : vector<1x8x512xbf16> to vector<8x512xbf16>
    %cst_9 = arith.constant dense<0.000000e+00> : vector<8x512xf32>
    %7 = tpu.matmul %4, %6, %cst_9 {dimension_numbers = #tpu.dot_dimension_numbers<[1], [0], [0], [1], [0, 0, 1, 1], [], []>} : vector<8x8xbf16>, vector<8x512xbf16>, vector<8x512xf32> -> vector<8x512xf32>
    %8 = arith.addf %3, %7 : vector<8x512xf32>
    %c0_10 = arith.constant 0 : index
    %c0_11 = arith.constant 0 : index
    %9 = vector.load %arg6[%c0_10, %c0_11] : memref<8x1xf32, #tpu.memory_space<vmem>>, vector<8x1xf32>
    %10 = vector.broadcast %9 : vector<8x1xf32> to vector<8x512xf32>
    %11 = arith.addf %8, %10 : vector<8x512xf32>
    %cst_12 = arith.constant 0.000000e+00 : f32
    %12 = vector.broadcast %cst_12 : f32 to vector<8x512xf32>
    %13 = arith.maximumf %11, %12 : vector<8x512xf32>
    %c0_13 = arith.constant 0 : index
    %c0_14 = arith.constant 0 : index
    %14 = vector.load %arg7[%c0_13, %c0_14] : memref<1x8xf32, #tpu.memory_space<vmem>>, vector<1x8xf32>
    %cst_15 = arith.constant dense<0.000000e+00> : vector<1x512xf32>
    %15 = tpu.matmul %14, %13, %cst_15 {dimension_numbers = #tpu.dot_dimension_numbers<[1], [0], [0], [1], [0, 0, 1, 1], [], []>} : vector<1x8xf32>, vector<8x512xf32>, vector<1x512xf32> -> vector<1x512xf32>
    %c0_16 = arith.constant 0 : index
    %c0_17 = arith.constant 0 : index
    %16 = memref.load %arg8[%c0_16, %c0_17] : memref<1x1xf32, #tpu.memory_space<smem>>
    %17 = vector.broadcast %16 : f32 to vector<1x512xf32>
    %18 = arith.addf %15, %17 : vector<1x512xf32>
    %19 = arith.negf %18 : vector<1x512xf32>
    %20 = math.exp %19 : vector<1x512xf32>
    %cst_18 = arith.constant 1.000000e+00 : f32
    %21 = vector.broadcast %cst_18 : f32 to vector<1x512xf32>
    %22 = arith.addf %21, %20 : vector<1x512xf32>
    %23 = arith.divf %21, %22 : vector<1x512xf32>
    %c0_19 = arith.constant 0 : index
    %c0_20 = arith.constant 0 : index
    %c0_21 = arith.constant 0 : index
    %24 = vector.load %arg3[%c0_19, %c0_20, %c0_21] : memref<1x8x512xbf16, #tpu.memory_space<vmem>>, vector<1x8x512xbf16>
    %25 = vector.shape_cast %24 : vector<1x8x512xbf16> to vector<8x512xbf16>
    %26 = arith.extf %25 : vector<8x512xbf16> to vector<8x512xf32>
    %27 = vector.broadcast %23 : vector<1x512xf32> to vector<8x512xf32>
    %28 = arith.mulf %26, %27 : vector<8x512xf32>
    %c0_22 = arith.constant 0 : index
    %c0_23 = arith.constant 0 : index
    %c0_24 = arith.constant 0 : index
    %29 = vector.load %arg9[%c0_22, %c0_23, %c0_24] : memref<1x8x512xf32, #tpu.memory_space<vmem>>, vector<1x8x512xf32>
    %30 = vector.shape_cast %29 : vector<1x8x512xf32> to vector<8x512xf32>
    %31 = vector.shape_cast %28 : vector<8x512xf32> to vector<1x8x512xf32>
    tpu.vector_store %arg9[%c0_22, %c0_23, %c0_24], %31 {strides = array<i32>} : memref<1x8x512xf32, #tpu.memory_space<vmem>>, vector<1x8x512xf32>,
    return
  }
  func.func @transform_0(%arg0: i32, %arg1: i32) -> (i32, i32, i32) {
    %c0_i32 = arith.constant 0 : i32
    %c0_i32_0 = arith.constant 0 : i32
    return %arg0, %c0_i32, %arg1 : i32, i32, i32
  }
  func.func @transform_1(%arg0: i32, %arg1: i32) -> (i32, i32, i32) {
    %c0_i32 = arith.constant 0 : i32
    %c0_i32_0 = arith.constant 0 : i32
    return %arg0, %c0_i32, %arg1 : i32, i32, i32
  }
  func.func @transform_2(%arg0: i32, %arg1: i32) -> (i32, i32) {
    %c0_i32 = arith.constant 0 : i32
    %c0_i32_0 = arith.constant 0 : i32
    %c0_i32_1 = arith.constant 0 : i32
    return %c0_i32, %c0_i32_0 : i32, i32
  }
  func.func @transform_3(%arg0: i32, %arg1: i32) -> (i32, i32) {
    %c0_i32 = arith.constant 0 : i32
    %c0_i32_0 = arith.constant 0 : i32
    %c0_i32_1 = arith.constant 0 : i32
    return %c0_i32, %c0_i32_0 : i32, i32
  }
  func.func @transform_4(%arg0: i32, %arg1: i32) -> (i32, i32) {
    %c0_i32 = arith.constant 0 : i32
    %c0_i32_0 = arith.constant 0 : i32
    %c0_i32_1 = arith.constant 0 : i32
    return %c0_i32, %c0_i32_0 : i32, i32
  }
  func.func @transform_5(%arg0: i32, %arg1: i32) -> (i32, i32) {
    %c0_i32 = arith.constant 0 : i32
    %c0_i32_0 = arith.constant 0 : i32
    %c0_i32_1 = arith.constant 0 : i32
    return %c0_i32, %c0_i32_0 : i32, i32
  }
  func.func @transform_6(%arg0: i32, %arg1: i32) -> (i32, i32) {
    %c0_i32 = arith.constant 0 : i32
    %c0_i32_0 = arith.constant 0 : i32
    %c0_i32_1 = arith.constant 0 : i32
    return %c0_i32, %c0_i32_0 : i32, i32
  }
  func.func @transform_7(%arg0: i32, %arg1: i32) -> (i32, i32, i32) {
    %c0_i32 = arith.constant 0 : i32
    %c0_i32_0 = arith.constant 0 : i32
    return %arg0, %c0_i32, %arg1 : i32, i32, i32
  }
}

</mosaic_0001>

<llo_original>
// kernel: attention_block.1
$region0: #{attention_block.1}
  #allocation0 [shape = 'u32[]', space=smem, size = 0x4, offset = 0x4, fixed_abs, tag = 'smem constant byte address 0x4 - core index']
  #allocation1 [shape = 'u32[144,128]{1,0:T(1,128)}', space=vmem, size = 0x12000, scoped, tag = 'internal scratch']
  #allocation2 [shape = 'f32[1,1]{1,0:T(1,128)S(6)}', space=smem, size = 0x200, scoped, tag = 'scoped memory for attention_block.1']
  %s0 = inlined_call_operand.vmem [shape: bf16[2,8,512], index: 0, kind: input, shape index: {}]
  %s1 = inlined_call_operand.vmem [shape: bf16[2,8,512], index: 1, kind: input, shape index: {}]
  %s2 = inlined_call_operand.vmem [shape: bf16[8,8], index: 2, kind: input, shape index: {}]
  %s3 = inlined_call_operand.vmem [shape: bf16[8,8], index: 3, kind: input, shape index: {}]
  %s4 = inlined_call_operand.vmem [shape: f32[8,1], index: 4, kind: input, shape index: {}]
  %s5 = inlined_call_operand.vmem [shape: f32[1,8], index: 5, kind: input, shape index: {}]
  %s6 = inlined_call_operand.<no memory space> [shape: f32[1,1], index: 6, kind: input, shape index: {}]
  %s7 = inlined_call_operand.vmem [shape: f32[2,8,512], index: 7, kind: output, shape index: {}]
  %s8 = sld [smem:[#allocation0]]
  $region61: #{attention_block.1} parent=0
    _
  %s10 = ssub.s32 1, %s8
  %s11 = scalar_select 0, %s10, %s8
  %12 = sst [smem:[#allocation2]] %s6
  loop: start=0, step=1, limit=4
  $region2: #{attention_block.1} parent=0 // loop_pre_header
    _
  $region3: #{attention_block.1} parent=0 // loop_header
    %s14 = sphi 0, %s18
    %p15 = scmp.ge.s32.totalorder %s14, 4
    %s21 = sphi 0, %s33
    %s22 = sphi 0, %s29
    %s23 = sphi 0, %s21
    %s24 = sphi 0, %s22
    %s25 = sphi 0, %s23
    %s26 = sphi 0, %s24
    %s38 = sphi 0, %s40
    %s41 = sphi 0, %s38
    %s42 = sphi 0, %s41
    %s58 = sphi 0, %s42
    %s66 = sphi 0, %s68
    %s69 = sphi 0, %s66
    %s70 = sphi 0, %s69
    %s86 = sphi 0, %s70
    %s90 = sphi 0, %s90
    %s92 = sphi 0, %s90
    %s93 = sphi 0, %s92
    %s107 = sphi 0, %s93
    %s111 = sphi 0, %s111
    %s113 = sphi 0, %s111
    %s114 = sphi 0, %s113
    %s128 = sphi 0, %s114
    %s132 = sphi 0, %s132
    %s134 = sphi 0, %s132
    %s135 = sphi 0, %s134
    %s149 = sphi 0, %s135
    %s153 = sphi 0, %s153
    %s155 = sphi 0, %s153
    %s156 = sphi 0, %s155
    %s170 = sphi 0, %s156
    %s174 = sphi 0, %s174
    %s176 = sphi 0, %s174
    %s177 = sphi 0, %s176
    %s191 = sphi 0, %s177
    %s199 = sphi 0, %s201
    %s202 = sphi 0, %s199
    %s203 = sphi 0, %s202
    %s219 = sphi 0, %s203
  $region4: #{attention_block.1} parent=0 // loop_header_branch
    %17 = sbr.rel (%p15) target = $region8
  $region5: #{attention_block.1} parent=0 // loop_body
    %s19 = ssub.s32 %s14, 1
    %s20 = ssub.s32 %s14, 2
    %s27 = sadd.s32 1, %s22
    %p28 = scmp.ge.s32.totalorder %s27, 1
    %s29 = scalar_select %p28, 0, %s27
    %s30 = sadd.s32 1, %s21
    %s31 = scalar_select %p28, %s30, %s21
    %p32 = scmp.ge.s32.totalorder %s31, 2
    %s33 = scalar_select %p32, 0, %s31
    %s34 = ssub.s32 %s21, %s33
    %s35 = ssub.s32 %s22, %s29
    %s36 = sor.u32 %s34, %s35
    %p37 = scmp.eq.s32.totalorder %s36, 0
    %s39 = sadd.s32 %s38, 1
    %s40 = scalar_select %p37, %s38, %s39
    %p43 = pneg %p37
    %p44 = scmp.eq.s32.totalorder %s14, 1
    %p45 = por %p43, %p44
    %p46 = scmp.ne.s32.totalorder %s38, %s41
    %p47 = scmp.eq.s32.totalorder %s14, 0
    %p48 = por %p46, %p47
    %p49 = scmp.ne.s32.totalorder %s38, %s41
    %p50 = scmp.eq.s32.totalorder %s19, 1
    %p51 = por %p49, %p50
    %p52 = scmp.ne.s32.totalorder %s41, %s42
    %p53 = scmp.eq.s32.totalorder %s19, 0
    %p54 = por %p52, %p53
    %p55 = scmp.ne.s32.totalorder %s41, %s42
    %p56 = scmp.eq.s32.totalorder %s20, 1
    %p57 = por %p55, %p56
    %p59 = scmp.ne.s32.totalorder %s42, %s58
    %p60 = scmp.eq.s32.totalorder %s20, 0
    %p61 = por %p59, %p60
    %s62 = ssub.s32 %s21, %s33
    %s63 = ssub.s32 %s22, %s29
    %s64 = sor.u32 %s62, %s63
    %p65 = scmp.eq.s32.totalorder %s64, 0
    %s67 = sadd.s32 %s66, 1
    %s68 = scalar_select %p65, %s66, %s67
    %p71 = pneg %p65
    %p72 = scmp.eq.s32.totalorder %s14, 1
    %p73 = por %p71, %p72
    %p74 = scmp.ne.s32.totalorder %s66, %s69
    %p75 = scmp.eq.s32.totalorder %s14, 0
    %p76 = por %p74, %p75
    %p77 = scmp.ne.s32.totalorder %s66, %s69
    %p78 = scmp.eq.s32.totalorder %s19, 1
    %p79 = por %p77, %p78
    %p80 = scmp.ne.s32.totalorder %s69, %s70
    %p81 = scmp.eq.s32.totalorder %s19, 0
    %p82 = por %p80, %p81
    %p83 = scmp.ne.s32.totalorder %s69, %s70
    %p84 = scmp.eq.s32.totalorder %s20, 1
    %p85 = por %p83, %p84
    %p87 = scmp.ne.s32.totalorder %s70, %s86
    %p88 = scmp.eq.s32.totalorder %s20, 0
    %p89 = por %p87, %p88
    %s91 = sadd.s32 %s90, 1
    %p94 = scmp.eq.s32.totalorder %s14, 1
    %p95 = scmp.ne.s32.totalorder %s90, %s92
    %p96 = scmp.eq.s32.totalorder %s14, 0
    %p97 = por %p95, %p96
    %p98 = scmp.ne.s32.totalorder %s90, %s92
    %p99 = scmp.eq.s32.totalorder %s19, 1
    %p100 = por %p98, %p99
    %p101 = scmp.ne.s32.totalorder %s92, %s93
    %p102 = scmp.eq.s32.totalorder %s19, 0
    %p103 = por %p101, %p102
    %p104 = scmp.ne.s32.totalorder %s92, %s93
    %p105 = scmp.eq.s32.totalorder %s20, 1
    %p106 = por %p104, %p105
    %p108 = scmp.ne.s32.totalorder %s93, %s107
    %p109 = scmp.eq.s32.totalorder %s20, 0
    %p110 = por %p108, %p109
    %s112 = sadd.s32 %s111, 1
    %p115 = scmp.eq.s32.totalorder %s14, 1
    %p116 = scmp.ne.s32.totalorder %s111, %s113
    %p117 = scmp.eq.s32.totalorder %s14, 0
    %p118 = por %p116, %p117
    %p119 = scmp.ne.s32.totalorder %s111, %s113
    %p120 = scmp.eq.s32.totalorder %s19, 1
    %p121 = por %p119, %p120
    %p122 = scmp.ne.s32.totalorder %s113, %s114
    %p123 = scmp.eq.s32.totalorder %s19, 0
    %p124 = por %p122, %p123
    %p125 = scmp.ne.s32.totalorder %s113, %s114
    %p126 = scmp.eq.s32.totalorder %s20, 1
    %p127 = por %p125, %p126
    %p129 = scmp.ne.s32.totalorder %s114, %s128
    %p130 = scmp.eq.s32.totalorder %s20, 0
    %p131 = por %p129, %p130
    %s133 = sadd.s32 %s132, 1
    %p136 = scmp.eq.s32.totalorder %s14, 1
    %p137 = scmp.ne.s32.totalorder %s132, %s134
    %p138 = scmp.eq.s32.totalorder %s14, 0
    %p139 = por %p137, %p138
    %p140 = scmp.ne.s32.totalorder %s132, %s134
    %p141 = scmp.eq.s32.totalorder %s19, 1
    %p142 = por %p140, %p141
    %p143 = scmp.ne.s32.totalorder %s134, %s135
    %p144 = scmp.eq.s32.totalorder %s19, 0
    %p145 = por %p143, %p144
    %p146 = scmp.ne.s32.totalorder %s134, %s135
    %p147 = scmp.eq.s32.totalorder %s20, 1
    %p148 = por %p146, %p147
    %p150 = scmp.ne.s32.totalorder %s135, %s149
    %p151 = scmp.eq.s32.totalorder %s20, 0
    %p152 = por %p150, %p151
    %s154 = sadd.s32 %s153, 1
    %p157 = scmp.eq.s32.totalorder %s14, 1
    %p158 = scmp.ne.s32.totalorder %s153, %s155
    %p159 = scmp.eq.s32.totalorder %s14, 0
    %p160 = por %p158, %p159
    %p161 = scmp.ne.s32.totalorder %s153, %s155
    %p162 = scmp.eq.s32.totalorder %s19, 1
    %p163 = por %p161, %p162
    %p164 = scmp.ne.s32.totalorder %s155, %s156
    %p165 = scmp.eq.s32.totalorder %s19, 0
    %p166 = por %p164, %p165
    %p167 = scmp.ne.s32.totalorder %s155, %s156
    %p168 = scmp.eq.s32.totalorder %s20, 1
    %p169 = por %p167, %p168
    %p171 = scmp.ne.s32.totalorder %s156, %s170
    %p172 = scmp.eq.s32.totalorder %s20, 0
    %p173 = por %p171, %p172
    %s175 = sadd.s32 %s174, 1
    %p178 = scmp.eq.s32.totalorder %s14, 1
    %p179 = scmp.ne.s32.totalorder %s174, %s176
    %p180 = scmp.eq.s32.totalorder %s14, 0
    %p181 = por %p179, %p180
    %p182 = scmp.ne.s32.totalorder %s174, %s176
    %p183 = scmp.eq.s32.totalorder %s19, 1
    %p184 = por %p182, %p183
    %p185 = scmp.ne.s32.totalorder %s176, %s177
    %p186 = scmp.eq.s32.totalorder %s19, 0
    %p187 = por %p185, %p186
    %p188 = scmp.ne.s32.totalorder %s176, %s177
    %p189 = scmp.eq.s32.totalorder %s20, 1
    %p190 = por %p188, %p189
    %p192 = scmp.ne.s32.totalorder %s177, %s191
    %p193 = scmp.eq.s32.totalorder %s20, 0
    %p194 = por %p192, %p193
    %s195 = ssub.s32 %s21, %s33
    %s196 = ssub.s32 %s22, %s29
    %s197 = sor.u32 %s195, %s196
    %p198 = scmp.eq.s32.totalorder %s197, 0
    %s200 = sadd.s32 %s199, 1
    %s201 = scalar_select %p198, %s199, %s200
    %p204 = pneg %p198
    %p205 = scmp.eq.s32.totalorder %s14, 1
    %p206 = por %p204, %p205
    %p207 = scmp.ne.s32.totalorder %s199, %s202
    %p208 = scmp.eq.s32.totalorder %s14, 0
    %p209 = por %p207, %p208
    %p210 = scmp.ne.s32.totalorder %s199, %s202
    %p211 = scmp.eq.s32.totalorder %s19, 1
    %p212 = por %p210, %p211
    %p213 = scmp.ne.s32.totalorder %s202, %s203
    %p214 = scmp.eq.s32.totalorder %s19, 0
    %p215 = por %p213, %p214
    %p216 = scmp.ne.s32.totalorder %s202, %s203
    %p217 = scmp.eq.s32.totalorder %s20, 1
    %p218 = por %p216, %p217
    %p220 = scmp.ne.s32.totalorder %s203, %s219
    %p221 = scmp.eq.s32.totalorder %s20, 0
    %p222 = por %p220, %p221
    %p223 = scmp.le.s32.totalorder 1, %s14
    %p224 = scmp.lt.s32.totalorder %s14, 3
    %p225 = pnand %p223, %p224
    %p226 = pneg %p225
    // Predicated region
    $region9: #{attention_block.1} parent=5 // pred_check
      _
    $region10: #{attention_block.1} parent=5 // pred_check_branch
      %228 = sbr.rel (%p225) target = $region12
    $region11: #{attention_block.1} parent=5 // pred_region
      %s229 = ssub.s32 %s14, 1
      // Predicated region
      $region13: #{attention_block.1} parent=11 // pred_check
        %p230 = pneg %p103
      $region14: #{attention_block.1} parent=11 // pred_check_branch
        %232 = sbr.rel (%p230) target = $region16
      $region15: #{attention_block.1} parent=11 // pred_region
        _
      $region16: #{attention_block.1} parent=11 // pred_fallthru
        _
      // Predicated region
      $region17: #{attention_block.1} parent=11 // pred_check
        %p233 = pneg %p124
      $region18: #{attention_block.1} parent=11 // pred_check_branch
        %235 = sbr.rel (%p233) target = $region20
      $region19: #{attention_block.1} parent=11 // pred_region
        _
      $region20: #{attention_block.1} parent=11 // pred_fallthru
        _
      // Predicated region
      $region21: #{attention_block.1} parent=11 // pred_check
        %p236 = pneg %p145
      $region22: #{attention_block.1} parent=11 // pred_check_branch
        %238 = sbr.rel (%p236) target = $region24
      $region23: #{attention_block.1} parent=11 // pred_region
        _
      $region24: #{attention_block.1} parent=11 // pred_fallthru
        _
      // Predicated region
      $region25: #{attention_block.1} parent=11 // pred_check
        %p239 = pneg %p166
      $region26: #{attention_block.1} parent=11 // pred_check_branch
        %241 = sbr.rel (%p239) target = $region28
      $region27: #{attention_block.1} parent=11 // pred_region
        _
      $region28: #{attention_block.1} parent=11 // pred_fallthru
        _
      // Predicated region
      $region29: #{attention_block.1} parent=11 // pred_check
        %p242 = pneg %p187
      $region30: #{attention_block.1} parent=11 // pred_check_branch
        %244 = sbr.rel (%p242) target = $region32
      $region31: #{attention_block.1} parent=11 // pred_region
        _
      $region32: #{attention_block.1} parent=11 // pred_fallthru
        _
    $region12: #{attention_block.1} parent=5 // pred_fallthru
      _
    %p245 = scmp.lt.s32.totalorder %s14, 2
    // Predicated region
    $region33: #{attention_block.1} parent=5 // pred_check
      %p246 = pneg %p245
    $region34: #{attention_block.1} parent=5 // pred_check_branch
      %248 = sbr.rel (%p246) target = $region36
    $region35: #{attention_block.1} parent=5 // pred_region
      // Predicated region
      $region37: #{attention_block.1} parent=35 // pred_check
        %p249 = pneg %p48
      $region38: #{attention_block.1} parent=35 // pred_check_branch
        %251 = sbr.rel (%p249) target = $region40
      $region39: #{attention_block.1} parent=35 // pred_region
        %s252 = smul.u32 4, %s22
        %p253 = scmp.lt.s32.totalorder %s21, 1
        %s254 = scalar_select %p253, %s21, 1
        %p255 = scmp.lt.s32.totalorder %s252, 3
        %s256 = scalar_select %p255, %s252, 3
        %s257 = smul.addr %s254, 4
        %s258 = sadd.s32 %s256, %s257
        %s259 = smul.addr %s258, 4
        %s260 = scalar_lea.vmem %s0, %s259
        %s261 = smul.u32 4, %s22
      $region40: #{attention_block.1} parent=35 // pred_fallthru
        _
      // Predicated region
      $region41: #{attention_block.1} parent=35 // pred_check
        %p262 = pneg %p76
      $region42: #{attention_block.1} parent=35 // pred_check_branch
        %264 = sbr.rel (%p262) target = $region44
      $region43: #{attention_block.1} parent=35 // pred_region
        %s265 = smul.u32 4, %s22
        %p266 = scmp.lt.s32.totalorder %s21, 1
        %s267 = scalar_select %p266, %s21, 1
        %p268 = scmp.lt.s32.totalorder %s265, 3
        %s269 = scalar_select %p268, %s265, 3
        %s270 = smul.addr %s267, 4
        %s271 = sadd.s32 %s269, %s270
        %s272 = smul.addr %s271, 4
        %s273 = scalar_lea.vmem %s1, %s272
        %s274 = smul.u32 4, %s22
      $region44: #{attention_block.1} parent=35 // pred_fallthru
        _
    $region36: #{attention_block.1} parent=5 // pred_fallthru
      _
    %p275 = scmp.le.s32.totalorder 1, %s14
    %p276 = scmp.lt.s32.totalorder %s14, 3
    %p277 = pnand %p275, %p276
    %p278 = pneg %p277
    // Predicated region
    $region45: #{attention_block.1} parent=5 // pred_check
      _
    $region46: #{attention_block.1} parent=5 // pred_check_branch
      %280 = sbr.rel (%p277) target = $region48
    $region47: #{attention_block.1} parent=5 // pred_region
      %s281 = ssub.s32 %s14, 1
      %s282 = smul.u32 4, %s24
      %p283 = scmp.lt.s32.totalorder %s23, 1
      %s284 = scalar_select %p283, %s23, 1
      %p285 = scmp.lt.s32.totalorder %s282, 3
      %s286 = scalar_select %p285, %s282, 3
      %s287 = smul.addr %s284, 4
      %s288 = sadd.s32 %s286, %s287
      %s289 = smul.addr %s288, 4
      %s290 = scalar_lea.vmem %s0, %s289
      %p291 = pneg %p54
      %p292 = pneg %p51
      %s293 = smul.u32 4, %s24
      %p294 = scmp.lt.s32.totalorder %s23, 1
      %s295 = scalar_select %p294, %s23, 1
      %p296 = scmp.lt.s32.totalorder %s293, 3
      %s297 = scalar_select %p296, %s293, 3
      %s298 = smul.addr %s295, 4
      %s299 = sadd.s32 %s297, %s298
      %s300 = smul.addr %s299, 4
      %s301 = scalar_lea.vmem %s1, %s300
      %p302 = pneg %p82
      %p303 = pneg %p79
      %p304 = pneg %p103
      %p305 = pneg %p100
      %p306 = pneg %p124
      %p307 = pneg %p121
      %p308 = pneg %p145
      %p309 = pneg %p142
      %p310 = pneg %p166
      %p311 = pneg %p163
      %p312 = pneg %p187
      %p313 = pneg %p184
      %p314 = pneg %p215
      %p315 = pneg %p212
      %s316 = smul.u32 4, %s24
      %p317 = scmp.lt.s32.totalorder %s23, 1
      %s318 = scalar_select %p317, %s23, 1
      %p319 = scmp.lt.s32.totalorder %s316, 3
      %s320 = scalar_select %p319, %s316, 3
      %s321 = smul.addr %s318, 4
      %s322 = sadd.s32 %s320, %s321
      %s323 = smul.addr %s322, 8
      %s324 = scalar_lea.vmem %s7, %s323
      %s325 = smul.u32 4, %s24
      %p326 = scmp.lt.s32.totalorder %s23, 1
      %s327 = scalar_select %p326, %s23, 1
      %p328 = scmp.lt.s32.totalorder %s325, 3
      %s329 = scalar_select %p328, %s325, 3
      %s330 = smul.addr %s327, 4
      %s331 = sadd.s32 %s329, %s330
      %s332 = smul.addr %s331, 4
      %s333 = scalar_lea.vmem %s0, %s332
      %s334 = smul.u32 4, %s24
      %s335 = smul.u32 4, %s24
      %p336 = scmp.lt.s32.totalorder %s23, 1
      %s337 = scalar_select %p336, %s23, 1
      %p338 = scmp.lt.s32.totalorder %s335, 3
      %s339 = scalar_select %p338, %s335, 3
      %s340 = smul.addr %s337, 4
      %s341 = sadd.s32 %s339, %s340
      %s342 = smul.addr %s341, 4
      %s343 = scalar_lea.vmem %s1, %s342
      %s344 = smul.u32 4, %s24
      %s345 = smul.u32 4, %s24
      %p346 = scmp.lt.s32.totalorder %s23, 1
      %s347 = scalar_select %p346, %s23, 1
      %p348 = scmp.lt.s32.totalorder %s345, 3
      %s349 = scalar_select %p348, %s345, 3
      %s350 = smul.addr %s347, 4
      %s351 = sadd.s32 %s349, %s350
      %s352 = smul.addr %s351, 8
      %s353 = scalar_lea.vmem %s7, %s352
      %s354 = smul.u32 4, %s24
      %v356 = vld [vmem:[%s2] sm:$0xf]
      %v357 = vld [vmem:[%s333] sm:$0xff]
      %v358 = vld [vmem:[%s333 + $0x8] sm:$0xff]
      %v359 = vld [vmem:[%s3] sm:$0xf]
      %v360 = vld [vmem:[%s343] sm:$0xff]
      %v361 = vld [vmem:[%s343 + $0x8] sm:$0xff]
      %v364 = vunpack.c.l.b16 %v360
      %v365 = vunpack.c.h.b16 %v360
      %v366 = vunpack.c.l.b16 %v361
      %v367 = vunpack.c.h.b16 %v361
      %v368 = vpack.c.b16 %v364, %v364
      %v369 = vpack.c.b16 %v365, %v365
      %v370 = vpack.c.b16 %v366, %v366
      %v371 = vpack.c.b16 %v367, %v367
      %vm372 = vcmask 64512
      %v374 = vsel %vm372, %v359, 0
      %vm376 = vcmask 1043456
      %v378 = vsel %vm376, %v368, 0
      %v381 = vsel %vm376, %v369, 0
      %v384 = vsel %vm376, %v370, 0
      %v387 = vsel %vm376, %v371, 0
      %389 = vmatprep.subr.bf16.mxu0 %v381
      %390 = vmatpush1.bf16.msra.mxu0 %v378
      %391 = vmatprep.subr.bf16.mxu0 0
      %392 = vmatpush1.bf16.msra.mxu0 0
      %393 = vmatprep.subr.bf16.mxu0 0
      %394 = vmatpush1.bf16.msra.mxu0 0
      %395 = vmatprep.subr.bf16.mxu0 0
      %396 = vmatpush1.bf16.msra.mxu0 0
      %397 = vmatprep.subr.bf16.mxu0 0
      %398 = vmatpush1.bf16.msra.mxu0 0
      %399 = vmatprep.subr.bf16.mxu0 0
      %400 = vmatpush1.bf16.msra.mxu0 0
      %401 = vmatprep.subr.bf16.mxu0 0
      %402 = vmatpush1.bf16.msra.mxu0 0
      %403 = vmatprep.subr.bf16.mxu0 0
      %404 = vmatpush1.bf16.msra.mxu0 0
      %405 = vmatprep.subr.bf16.mxu0 0
      %406 = vmatpush1.bf16.msra.mxu0 0
      %407 = vmatprep.subr.bf16.mxu0 0
      %408 = vmatpush1.bf16.msra.mxu0 0
      %409 = vmatprep.subr.bf16.mxu0 0
      %410 = vmatpush1.bf16.msra.mxu0 0
      %411 = vmatprep.subr.bf16.mxu0 0
      %412 = vmatpush1.bf16.msra.mxu0 0
      %413 = vmatprep.subr.bf16.mxu0 0
      %414 = vmatpush1.bf16.msra.mxu0 0
      %415 = vmatprep.subr.bf16.mxu0 0
      %416 = vmatpush1.bf16.msra.mxu0 0
      %417 = vmatprep.subr.bf16.mxu0 0
      %418 = vmatpush1.bf16.msra.mxu0 0
      %419 = vmatprep.subr.bf16.mxu0 0
      %420 = vmatpush1.bf16.msra.mxu0 0
      %421 = vmatprep.mubr.bf16.mxu0 0
      %422 = vmatmul.mubr.bf16.gmra.mrb[0].mxu0 %v374
      %v423 = vpop.f32.mrb[0].mxu0
      %v424 = vadd.f32 0.0, %v423
      %v425 = vpop.f32.mrb[0].mxu0
      %v426 = vadd.f32 0.0, %v425
      %v427 = vpop.f32.mrb[0].mxu0
      %v428 = vpop.f32.mrb[0].mxu0
      %429 = vdwg.mxu0
      %430 = vmatprep.subr.bf16.mxu0 %v387
      %431 = vmatpush1.bf16.msra.mxu0 %v384
      %432 = vmatprep.subr.bf16.mxu0 0
      %433 = vmatpush1.bf16.msra.mxu0 0
      %434 = vmatprep.subr.bf16.mxu0 0
      %435 = vmatpush1.bf16.msra.mxu0 0
      %436 = vmatprep.subr.bf16.mxu0 0
      %437 = vmatpush1.bf16.msra.mxu0 0
      %438 = vmatprep.subr.bf16.mxu0 0
      %439 = vmatpush1.bf16.msra.mxu0 0
      %440 = vmatprep.subr.bf16.mxu0 0
      %441 = vmatpush1.bf16.msra.mxu0 0
      %442 = vmatprep.subr.bf16.mxu0 0
      %443 = vmatpush1.bf16.msra.mxu0 0
      %444 = vmatprep.subr.bf16.mxu0 0
      %445 = vmatpush1.bf16.msra.mxu0 0
      %446 = vmatprep.subr.bf16.mxu0 0
      %447 = vmatpush1.bf16.msra.mxu0 0
      %448 = vmatprep.subr.bf16.mxu0 0
      %449 = vmatpush1.bf16.msra.mxu0 0
      %450 = vmatprep.subr.bf16.mxu0 0
      %451 = vmatpush1.bf16.msra.mxu0 0
      %452 = vmatprep.subr.bf16.mxu0 0
      %453 = vmatpush1.bf16.msra.mxu0 0
      %454 = vmatprep.subr.bf16.mxu0 0
      %455 = vmatpush1.bf16.msra.mxu0 0
      %456 = vmatprep.subr.bf16.mxu0 0
      %457 = vmatpush1.bf16.msra.mxu0 0
      %458 = vmatprep.subr.bf16.mxu0 0
      %459 = vmatpush1.bf16.msra.mxu0 0
      %460 = vmatprep.subr.bf16.mxu0 0
      %461 = vmatpush1.bf16.msra.mxu0 0
      %462 = vmatprep.mubr.bf16.mxu0 0
      %463 = vmatmul.mubr.bf16.gmra.mrb[0].mxu0 %v374
      %v464 = vpop.f32.mrb[0].mxu0
      %v465 = vadd.f32 0.0, %v464
      %v466 = vpop.f32.mrb[0].mxu0
      %v467 = vadd.f32 0.0, %v466
      %v468 = vpop.f32.mrb[0].mxu0
      %v469 = vpop.f32.mrb[0].mxu0
      %470 = vdwg.mxu0
      %v473 = vunpack.c.l.b16 %v357
      %v474 = vunpack.c.h.b16 %v357
      %v475 = vunpack.c.l.b16 %v358
      %v476 = vunpack.c.h.b16 %v358
      %v477 = vpack.c.b16 %v473, %v473
      %v478 = vpack.c.b16 %v474, %v474
      %v479 = vpack.c.b16 %v475, %v475
      %v480 = vpack.c.b16 %v476, %v476
      %v482 = vsel %vm372, %v356, 0
      %v485 = vsel %vm376, %v477, 0
      %v488 = vsel %vm376, %v478, 0
      %v491 = vsel %vm376, %v479, 0
      %v494 = vsel %vm376, %v480, 0
      %496 = vmatprep.subr.bf16.mxu0 %v488
      %497 = vmatpush1.bf16.msra.mxu0 %v485
      %498 = vmatprep.subr.bf16.mxu0 0
      %499 = vmatpush1.bf16.msra.mxu0 0
      %500 = vmatprep.subr.bf16.mxu0 0
      %501 = vmatpush1.bf16.msra.mxu0 0
      %502 = vmatprep.subr.bf16.mxu0 0
      %503 = vmatpush1.bf16.msra.mxu0 0
      %504 = vmatprep.subr.bf16.mxu0 0
      %505 = vmatpush1.bf16.msra.mxu0 0
      %506 = vmatprep.subr.bf16.mxu0 0
      %507 = vmatpush1.bf16.msra.mxu0 0
      %508 = vmatprep.subr.bf16.mxu0 0
      %509 = vmatpush1.bf16.msra.mxu0 0
      %510 = vmatprep.subr.bf16.mxu0 0
      %511 = vmatpush1.bf16.msra.mxu0 0
      %512 = vmatprep.subr.bf16.mxu0 0
      %513 = vmatpush1.bf16.msra.mxu0 0
      %514 = vmatprep.subr.bf16.mxu0 0
      %515 = vmatpush1.bf16.msra.mxu0 0
      %516 = vmatprep.subr.bf16.mxu0 0
      %517 = vmatpush1.bf16.msra.mxu0 0
      %518 = vmatprep.subr.bf16.mxu0 0
      %519 = vmatpush1.bf16.msra.mxu0 0
      %520 = vmatprep.subr.bf16.mxu0 0
      %521 = vmatpush1.bf16.msra.mxu0 0
      %522 = vmatprep.subr.bf16.mxu0 0
      %523 = vmatpush1.bf16.msra.mxu0 0
      %524 = vmatprep.subr.bf16.mxu0 0
      %525 = vmatpush1.bf16.msra.mxu0 0
      %526 = vmatprep.subr.bf16.mxu0 0
      %527 = vmatpush1.bf16.msra.mxu0 0
      %528 = vmatprep.mubr.bf16.mxu0 0
      %529 = vmatmul.mubr.bf16.gmra.mrb[0].mxu0 %v482
      %v530 = vpop.f32.mrb[0].mxu0
      %v531 = vadd.f32 %v424, %v530
      %v532 = vpop.f32.mrb[0].mxu0
      %v533 = vadd.f32 %v426, %v532
      %v534 = vpop.f32.mrb[0].mxu0
      %v535 = vpop.f32.mrb[0].mxu0
      %536 = vdwg.mxu0
      %537 = vmatprep.subr.bf16.mxu0 %v494
      %538 = vmatpush1.bf16.msra.mxu0 %v491
      %539 = vmatprep.subr.bf16.mxu0 0
      %540 = vmatpush1.bf16.msra.mxu0 0
      %541 = vmatprep.subr.bf16.mxu0 0
      %542 = vmatpush1.bf16.msra.mxu0 0
      %543 = vmatprep.subr.bf16.mxu0 0
      %544 = vmatpush1.bf16.msra.mxu0 0
      %545 = vmatprep.subr.bf16.mxu0 0
      %546 = vmatpush1.bf16.msra.mxu0 0
      %547 = vmatprep.subr.bf16.mxu0 0
      %548 = vmatpush1.bf16.msra.mxu0 0
      %549 = vmatprep.subr.bf16.mxu0 0
      %550 = vmatpush1.bf16.msra.mxu0 0
      %551 = vmatprep.subr.bf16.mxu0 0
      %552 = vmatpush1.bf16.msra.mxu0 0
      %553 = vmatprep.subr.bf16.mxu0 0
      %554 = vmatpush1.bf16.msra.mxu0 0
      %555 = vmatprep.subr.bf16.mxu0 0
      %556 = vmatpush1.bf16.msra.mxu0 0
      %557 = vmatprep.subr.bf16.mxu0 0
      %558 = vmatpush1.bf16.msra.mxu0 0
      %559 = vmatprep.subr.bf16.mxu0 0
      %560 = vmatpush1.bf16.msra.mxu0 0
      %561 = vmatprep.subr.bf16.mxu0 0
      %562 = vmatpush1.bf16.msra.mxu0 0
      %563 = vmatprep.subr.bf16.mxu0 0
      %564 = vmatpush1.bf16.msra.mxu0 0
      %565 = vmatprep.subr.bf16.mxu0 0
      %566 = vmatpush1.bf16.msra.mxu0 0
      %567 = vmatprep.subr.bf16.mxu0 0
      %568 = vmatpush1.bf16.msra.mxu0 0
      %569 = vmatprep.mubr.bf16.mxu0 0
      %570 = vmatmul.mubr.bf16.gmra.mrb[0].mxu0 %v482
      %v571 = vpop.f32.mrb[0].mxu0
      %v572 = vadd.f32 %v465, %v571
      %v573 = vpop.f32.mrb[0].mxu0
      %v574 = vadd.f32 %v467, %v573
      %v575 = vpop.f32.mrb[0].mxu0
      %v576 = vpop.f32.mrb[0].mxu0
      %577 = vdwg.mxu0
      %v578 = vld [vmem:[%s4] sm:$0xff]
      %580 = vset.pattern.permute.xlu0 0
      %581 = vperm.xlu0 %580, %v578
      %v582 = vpop.permute.xlu0 %581
      %v584 = vadd.f32 %v531, %v582
      %v585 = vadd.f32 %v533, %v582
      %v586 = vadd.f32 %v572, %v582
      %v587 = vadd.f32 %v574, %v582
      %v588 = vmax.f32 %v584, 0.0
      %v589 = vmax.f32 %v585, 0.0
      %v590 = vmax.f32 %v586, 0.0
      %v591 = vmax.f32 %v587, 0.0
      %v592 = vld [vmem:[%s5] sm:$0x1]
      %s593 = sld [smem:[#allocation2]]
      %v594 = vstv %s593
      %v596 = vsel %vm372, %v592, 0
      %598 = vmatprep.subr.mxu0 %v589
      %599 = vmatpush1.msra.mxu0 %v588
      %600 = vmatprep.subr.mxu0 0.0
      %601 = vmatpush1.msra.mxu0 0.0
      %602 = vmatprep.subr.mxu0 0.0
      %603 = vmatpush1.msra.mxu0 0.0
      %604 = vmatprep.subr.mxu0 0.0
      %605 = vmatpush1.msra.mxu0 0.0
      %606 = vmatprep.subr.mxu0 0.0
      %607 = vmatpush1.msra.mxu0 0.0
      %608 = vmatprep.subr.mxu0 0.0
      %609 = vmatpush1.msra.mxu0 0.0
      %610 = vmatprep.subr.mxu0 0.0
      %611 = vmatpush1.msra.mxu0 0.0
      %612 = vmatprep.subr.mxu0 0.0
      %613 = vmatpush1.msra.mxu0 0.0
      %614 = vmatprep.subr.mxu0 0.0
      %615 = vmatpush1.msra.mxu0 0.0
      %616 = vmatprep.subr.mxu0 0.0
      %617 = vmatpush1.msra.mxu0 0.0
      %618 = vmatprep.subr.mxu0 0.0
      %619 = vmatpush1.msra.mxu0 0.0
      %620 = vmatprep.subr.mxu0 0.0
      %621 = vmatpush1.msra.mxu0 0.0
      %622 = vmatprep.subr.mxu0 0.0
      %623 = vmatpush1.msra.mxu0 0.0
      %624 = vmatprep.subr.mxu0 0.0
      %625 = vmatpush1.msra.mxu0 0.0
      %626 = vmatprep.subr.mxu0 0.0
      %627 = vmatpush1.msra.mxu0 0.0
      %628 = vmatprep.subr.mxu0 0.0
      %629 = vmatpush1.msra.mxu0 0.0
      %630 = vmatprep.subr.mxu0 0.0
      %631 = vmatpush1.msra.mxu0 0.0
      %632 = vmatprep.subr.mxu0 0.0
      %633 = vmatpush1.msra.mxu0 0.0
      %634 = vmatprep.subr.mxu0 0.0
      %635 = vmatpush1.msra.mxu0 0.0
      %636 = vmatprep.subr.mxu0 0.0
      %637 = vmatpush1.msra.mxu0 0.0
      %638 = vmatprep.subr.mxu0 0.0
      %639 = vmatpush1.msra.mxu0 0.0
      %640 = vmatprep.subr.mxu0 0.0
      %641 = vmatpush1.msra.mxu0 0.0
      %642 = vmatprep.subr.mxu0 0.0
      %643 = vmatpush1.msra.mxu0 0.0
      %644 = vmatprep.subr.mxu0 0.0
      %645 = vmatpush1.msra.mxu0 0.0
      %646 = vmatprep.subr.mxu0 0.0
      %647 = vmatpush1.msra.mxu0 0.0
      %648 = vmatprep.subr.mxu0 0.0
      %649 = vmatpush1.msra.mxu0 0.0
      %650 = vmatprep.subr.mxu0 0.0
      %651 = vmatpush1.msra.mxu0 0.0
      %652 = vmatprep.subr.mxu0 0.0
      %653 = vmatpush1.msra.mxu0 0.0
      %654 = vmatprep.subr.mxu0 0.0
      %655 = vmatpush1.msra.mxu0 0.0
      %656 = vmatprep.subr.mxu0 0.0
      %657 = vmatpush1.msra.mxu0 0.0
      %658 = vmatprep.subr.mxu0 0.0
      %659 = vmatpush1.msra.mxu0 0.0
      %660 = vmatprep.subr.mxu0 0.0
      %661 = vmatpush1.msra.mxu0 0.0
      %662 = vmatprep.mubr.f32.mxu0 0.0
      %663 = vmatmul.mubr.f32.gmra.mrb[0].mxu0 %v596
      %v664 = vpop.f32.mrb[0].mxu0
      %v665 = vadd.f32 %v594, %v664
      %v666 = vpop.f32.mrb[0].mxu0
      %v667 = vadd.f32 %v594, %v666
      %668 = vdwg.mxu0
      %669 = vmatprep.subr.mxu0 %v591
      %670 = vmatpush1.msra.mxu0 %v590
      %671 = vmatprep.subr.mxu0 0.0
      %672 = vmatpush1.msra.mxu0 0.0
      %673 = vmatprep.subr.mxu0 0.0
      %674 = vmatpush1.msra.mxu0 0.0
      %675 = vmatprep.subr.mxu0 0.0
      %676 = vmatpush1.msra.mxu0 0.0
      %677 = vmatprep.subr.mxu0 0.0
      %678 = vmatpush1.msra.mxu0 0.0
      %679 = vmatprep.subr.mxu0 0.0
      %680 = vmatpush1.msra.mxu0 0.0
      %681 = vmatprep.subr.mxu0 0.0
      %682 = vmatpush1.msra.mxu0 0.0
      %683 = vmatprep.subr.mxu0 0.0
      %684 = vmatpush1.msra.mxu0 0.0
      %685 = vmatprep.subr.mxu0 0.0
      %686 = vmatpush1.msra.mxu0 0.0
      %687 = vmatprep.subr.mxu0 0.0
      %688 = vmatpush1.msra.mxu0 0.0
      %689 = vmatprep.subr.mxu0 0.0
      %690 = vmatpush1.msra.mxu0 0.0
      %691 = vmatprep.subr.mxu0 0.0
      %692 = vmatpush1.msra.mxu0 0.0
      %693 = vmatprep.subr.mxu0 0.0
      %694 = vmatpush1.msra.mxu0 0.0
      %695 = vmatprep.subr.mxu0 0.0
      %696 = vmatpush1.msra.mxu0 0.0
      %697 = vmatprep.subr.mxu0 0.0
      %698 = vmatpush1.msra.mxu0 0.0
      %699 = vmatprep.subr.mxu0 0.0
      %700 = vmatpush1.msra.mxu0 0.0
      %701 = vmatprep.subr.mxu0 0.0
      %702 = vmatpush1.msra.mxu0 0.0
      %703 = vmatprep.subr.mxu0 0.0
      %704 = vmatpush1.msra.mxu0 0.0
      %705 = vmatprep.subr.mxu0 0.0
      %706 = vmatpush1.msra.mxu0 0.0
      %707 = vmatprep.subr.mxu0 0.0
      %708 = vmatpush1.msra.mxu0 0.0
      %709 = vmatprep.subr.mxu0 0.0
      %710 = vmatpush1.msra.mxu0 0.0
      %711 = vmatprep.subr.mxu0 0.0
      %712 = vmatpush1.msra.mxu0 0.0
      %713 = vmatprep.subr.mxu0 0.0
      %714 = vmatpush1.msra.mxu0 0.0
      %715 = vmatprep.subr.mxu0 0.0
      %716 = vmatpush1.msra.mxu0 0.0
      %717 = vmatprep.subr.mxu0 0.0
      %718 = vmatpush1.msra.mxu0 0.0
      %719 = vmatprep.subr.mxu0 0.0
      %720 = vmatpush1.msra.mxu0 0.0
      %721 = vmatprep.subr.mxu0 0.0
      %722 = vmatpush1.msra.mxu0 0.0
      %723 = vmatprep.subr.mxu0 0.0
      %724 = vmatpush1.msra.mxu0 0.0
      %725 = vmatprep.subr.mxu0 0.0
      %726 = vmatpush1.msra.mxu0 0.0
      %727 = vmatprep.subr.mxu0 0.0
      %728 = vmatpush1.msra.mxu0 0.0
      %729 = vmatprep.subr.mxu0 0.0
      %730 = vmatpush1.msra.mxu0 0.0
      %731 = vmatprep.subr.mxu0 0.0
      %732 = vmatpush1.msra.mxu0 0.0
      %733 = vmatprep.mubr.f32.mxu0 0.0
      %734 = vmatmul.mubr.f32.gmra.mrb[0].mxu0 %v596
      %v735 = vpop.f32.mrb[0].mxu0
      %v736 = vadd.f32 %v594, %v735
      %v737 = vpop.f32.mrb[0].mxu0
      %v738 = vadd.f32 %v594, %v737
      %739 = vdwg.mxu0
      %v740 = vxor.u32 %v665, 2147483648
      %v741 = vxor.u32 %v667, 2147483648
      %v742 = vxor.u32 %v736, 2147483648
      %v743 = vxor.u32 %v738, 2147483648
      %v744 = vmul.f32 %v740, 1.442695
      %v745 = vpow.pop %v744
      %v746 = vmul.f32 %v741, 1.442695
      %v747 = vpow.pop %v746
      %v748 = vmul.f32 %v742, 1.442695
      %v749 = vpow.pop %v748
      %v750 = vmul.f32 %v743, 1.442695
      %v751 = vpow.pop %v750
      %v752 = vadd.f32 %v745, 1.0
      %v753 = vadd.f32 %v747, 1.0
      %v754 = vadd.f32 %v749, 1.0
      %v755 = vadd.f32 %v751, 1.0
      %v756 = vrcp.pop %v752
      %v757 = vmul.f32 1.0, %v756
      %v758 = vrcp.pop %v753
      %v759 = vmul.f32 1.0, %v758
      %v760 = vrcp.pop %v754
      %v761 = vmul.f32 1.0, %v760
      %v762 = vrcp.pop %v755
      %v763 = vmul.f32 1.0, %v762
      %v764 = vunpack.c.l.bf16 %v360
      %v765 = vunpack.c.h.bf16 %v360
      %v766 = vunpack.c.l.bf16 %v361
      %v767 = vunpack.c.h.bf16 %v361
      %v768 = vlaneseq
      %v769 = vshrl.u32 %v768, 7
      %v770 = vsub.s32 0, %v769
      %v771 = vrot.slane %v757, %v770
      %v772 = vlaneseq
      %v773 = vshrl.u32 %v772, 7
      %v774 = vsub.s32 0, %v773
      %v775 = vrot.slane %v759, %v774
      %v776 = vlaneseq
      %v777 = vshrl.u32 %v776, 7
      %v778 = vsub.s32 0, %v777
      %v779 = vrot.slane %v761, %v778
      %v780 = vlaneseq
      %v781 = vshrl.u32 %v780, 7
      %v782 = vsub.s32 0, %v781
      %v783 = vrot.slane %v763, %v782
      %v784 = vmul.f32 %v764, %v771
      %v785 = vmul.f32 %v765, %v775
      %v786 = vmul.f32 %v766, %v779
      %v787 = vmul.f32 %v767, %v783
      %788 = vst [vmem:[%s353] sm:$0xff] %v784
      %789 = vst [vmem:[%s353 + $0x8] sm:$0xff] %v785
      %790 = vst [vmem:[%s353 + $0x10] sm:$0xff] %v786
      %791 = vst [vmem:[%s353 + $0x18] sm:$0xff] %v787
      %s792 = smul.u32 4, %s24
      %p793 = scmp.lt.s32.totalorder %s23, 1
      %s794 = scalar_select %p793, %s23, 1
      %p795 = scmp.lt.s32.totalorder %s792, 3
      %s796 = scalar_select %p795, %s792, 3
      %s797 = smul.addr %s794, 4
      %s798 = sadd.s32 %s796, %s797
      %s799 = smul.addr %s798, 8
      %s800 = scalar_lea.vmem %s7, %s799
      // Predicated region
      $region49: #{attention_block.1} parent=47 // pred_check
        %p801 = pneg %p212
      $region50: #{attention_block.1} parent=47 // pred_check_branch
        %803 = sbr.rel (%p801) target = $region52
      $region51: #{attention_block.1} parent=47 // pred_region
        %s804 = smul.u32 4, %s24
      $region52: #{attention_block.1} parent=47 // pred_fallthru
        _
    $region48: #{attention_block.1} parent=5 // pred_fallthru
      _
    %p805 = scmp.le.s32.totalorder 2, %s14
    // Predicated region
    $region53: #{attention_block.1} parent=5 // pred_check
      %p806 = pneg %p805
    $region54: #{attention_block.1} parent=5 // pred_check_branch
      %808 = sbr.rel (%p806) target = $region56
    $region55: #{attention_block.1} parent=5 // pred_region
      %s809 = ssub.s32 %s14, 2
      // Predicated region
      $region57: #{attention_block.1} parent=55 // pred_check
        %p810 = pneg %p218
      $region58: #{attention_block.1} parent=55 // pred_check_branch
        %812 = sbr.rel (%p810) target = $region60
      $region59: #{attention_block.1} parent=55 // pred_region
        %s813 = smul.u32 4, %s26
        %p814 = scmp.lt.s32.totalorder %s25, 1
        %s815 = scalar_select %p814, %s25, 1
        %p816 = scmp.lt.s32.totalorder %s813, 3
        %s817 = scalar_select %p816, %s813, 3
        %s818 = smul.addr %s815, 4
        %s819 = sadd.s32 %s817, %s818
        %s820 = smul.addr %s819, 8
        %s821 = scalar_lea.vmem %s7, %s820
      $region60: #{attention_block.1} parent=55 // pred_fallthru
        _
    $region56: #{attention_block.1} parent=5 // pred_fallthru
      _
  $region6: #{attention_block.1} parent=0 // loop_footer
    %s18 = sadd.s32 1, %s14
  $region7: #{attention_block.1} parent=0 // loop_footer_branch
    %13 = sbr.rel target = $region3
  $region8: #{attention_block.1} parent=0 // loop_exit
    _

</llo_original>
